<compile_context>
chip_gen: v5e
topology: v5e:2x2
jax: 0.10.0
libtpu: 0.0.40
codegen_flags: <defaults>
</compile_context>

<pallas_src>
import functools

import jax
import jax.numpy as jnp
from jax.experimental import pallas as pl
from jax.experimental.pallas import tpu as pltpu

EPS_NORM = 1e-12   # F.normalize default eps
EPS_LOSS = 1e-08   # SupConLoss.epsilon


def supcon_kernel(temp_ref, feats_ref, xct_ref, labr_ref, labc_ref, out_ref,
                  *, use_bf16_matmul=False):
    """One row tile: TQ anchors against all N contrast columns.

    temp_ref  : (1, 1)  temperature scalar in SMEM
    feats_ref : [TQ, d] raw full_features rows for this tile (f32)
    xct_ref   : [d,  N] column-normalized full_features, pre-transposed (resident)
    labr_ref  : [1,  N] tiled labels (int32), lane-dense resident row
    labc_ref  : [TQ, 1] labels of this tile's anchors (int32)
    out_ref   : [1,  1] scalar loss accumulator (resident across the grid)
    """
    pid = pl.program_id(0)
    tq = feats_ref.shape[0]
    n = labr_ref.shape[1]

    @pl.when(pid == 0)
    def _init():
        out_ref[...] = jnp.zeros_like(out_ref)

    # Anchor operand: F.normalize row-wise, with the exp(t).clamp(min=100)
    # scale folded into the O(TQ*d) normalization (saves a [TQ, N] multiply).
    x = feats_ref[...].astype(jnp.float32)                         # [TQ, d]
    scale = jnp.maximum(jnp.exp(temp_ref[0, 0]), 100.0)
    row_norm = jnp.sqrt(jnp.sum(x * x, axis=1, keepdims=True))     # [TQ, 1]
    xr = x * (scale / jnp.maximum(row_norm, EPS_NORM))             # [TQ, d]

    xct = xct_ref[...]                                             # [d, N]
    if use_bf16_matmul:
        # Optional MXU speedup; off by default to keep exact f32 parity with
        # the reference (at small d the MXU is nearly idle anyway).
        xr = xr.astype(jnp.bfloat16)
        xct = xct.astype(jnp.bfloat16)

    # anchor_dot_contrast slab for this row tile.
    a = jax.lax.dot_general(xr, xct, (((1,), (0,)), ((), ())),
                            preferred_element_type=jnp.float32)    # [TQ, N]
    logits = a - jnp.max(a, axis=1, keepdims=True)

    # Masks fused directly into the row reductions (no NxN mask temporaries).
    row_ids = pid * tq + jax.lax.broadcasted_iota(jnp.int32, (tq, n), 0)
    col_ids = jax.lax.broadcasted_iota(jnp.int32, (tq, n), 1)
    not_diag = row_ids != col_ids
    pos = (labc_ref[...] == labr_ref[...]) & not_diag              # [TQ, N]

    denom = jnp.sum(jnp.where(not_diag, jnp.exp(logits), 0.0),
                    axis=1, keepdims=True)                         # [TQ, 1]
    log_denom = jnp.log(denom + EPS_LOSS)
    num = jnp.sum(jnp.where(pos, logits, 0.0), axis=1, keepdims=True)
    npos = jnp.sum(pos.astype(jnp.float32), axis=1, keepdims=True)

    # mean_log_prob_pos = sum(pos * (logits - log_denom)) / npos
    mean_log_prob_pos = num / npos - log_denom                     # [TQ, 1]

    out_ref[...] += jnp.sum(mean_log_prob_pos, axis=0, keepdims=True)

    @pl.when(pid == pl.num_programs(0) - 1)
    def _finalize():
        # loss = -mean over all N anchors (view(views, bsz).mean() == mean over N)
        out_ref[...] = -out_ref[...] / n


def _pick_row_tile(n, max_tile=256):
    """Largest power-of-two row tile (>=8) dividing N; fallback: one tile."""
    t = max_tile
    while t >= 8:
        if t <= n and n % t == 0:
            return t
        t //= 2
    return n


def supcon_loss(features, labels, temperature, *, max_row_tile=256,
                use_bf16_matmul=False):
    """features: [bsz, n_views, ...] f32, labels: [bsz] int, temperature: [1]."""
    bsz, views = features.shape[0], features.shape[1]
    feats = features.reshape(bsz, views, -1).astype(jnp.float32)
    d = feats.shape[-1]
    n = views * bsz

    # torch.cat(torch.unbind(features, dim=1), dim=0) -> [views*bsz, d]
    full = jnp.transpose(feats, (1, 0, 2)).reshape(n, d)

    # F.normalize(full_features.T): column (per-feature) normalization, done
    # once by XLA and handed to the kernel pre-transposed as a lane-dense
    # [d, N] block so the in-kernel contraction is (1, 0) with no transpose.
    col_norm = jnp.sqrt(jnp.sum(full * full, axis=0, keepdims=True))   # [1, d]
    xct = jnp.transpose(full / jnp.maximum(col_norm, EPS_NORM))        # [d, N]

    # mask.repeat(views, views) of eq(labels, labels.T) == eq of tiled labels.
    lab = jnp.tile(labels.astype(jnp.int32).reshape(-1), views)        # [N]
    lab_row = lab.reshape(1, n)
    lab_col = lab.reshape(n, 1)

    temp_2d = temperature.astype(jnp.float32).reshape(1, 1)

    tq = _pick_row_tile(n, max_row_tile)
    grid = (n // tq,)

    # VMEM budget: resident [d,N] RHS (x2 buffers) + pipelined [TQ,d] LHS tiles
    # (x2) + ~5 live [TQ,N] f32 slabs + headroom.  Capped at 64 MiB (v7x
    # physical VMEM); very large N additionally needs a smaller max_row_tile.
    est = 2 * d * n * 4 + 4 * tq * d * 4 + 5 * tq * n * 4 + (4 << 20)
    vmem_limit = int(max(16 << 20, min(est, 64 << 20)))

    kernel = functools.partial(supcon_kernel, use_bf16_matmul=use_bf16_matmul)

    out = pl.pallas_call(
        kernel,
        out_shape=jax.ShapeDtypeStruct((1, 1), jnp.float32),
        grid=grid,
        in_specs=[
            pl.BlockSpec(memory_space=pltpu.SMEM),          # temperature (1,1)
            pl.BlockSpec((tq, d), lambda i: (i, 0)),        # anchor feature rows
            pl.BlockSpec((d, n), lambda i: (0, 0)),         # contrast [d,N], resident
            pl.BlockSpec((1, n), lambda i: (0, 0)),         # tiled labels row, resident
            pl.BlockSpec((tq, 1), lambda i: (i, 0)),        # anchor labels
        ],
        out_specs=pl.BlockSpec((1, 1), lambda i: (0, 0)),   # scalar loss accumulator
        compiler_params=pltpu.CompilerParams(
            dimension_semantics=("arbitrary",),
            vmem_limit_bytes=vmem_limit),
    )(temp_2d, full, xct, lab_row, lab_col)
    return out[0, 0]


def supcon_loss_ref(features, labels, temperature):
    """Pure-JAX reference mirroring the PyTorch code exactly."""
    bsz, views = features.shape[0], features.shape[1]
    feats = features.reshape(bsz, views, -1).astype(jnp.float32)
    n = views * bsz
    full = jnp.transpose(feats, (1, 0, 2)).reshape(n, -1)

    xr = full / jnp.maximum(
        jnp.linalg.norm(full, axis=1, keepdims=True), EPS_NORM)
    xt = full.T
    xct = xt / jnp.maximum(
        jnp.linalg.norm(xt, axis=1, keepdims=True), EPS_NORM)
    scale = jnp.maximum(jnp.exp(temperature[0]), 100.0)
    a = xr @ xct * scale

    lab = jnp.tile(labels.reshape(-1), views)
    mask = (lab[:, None] == lab[None, :]).astype(jnp.float32)
    logits = a - jnp.max(a, axis=1, keepdims=True)
    logits_mask = 1.0 - jnp.eye(n, dtype=jnp.float32)
    mask = mask * logits_mask
    exp_logits = jnp.exp(logits) * logits_mask
    log_prob = logits - jnp.log(exp_logits.sum(1, keepdims=True) + EPS_LOSS)
    mean_log_prob_pos = (mask * log_prob).sum(1) / mask.sum(1)
    return -jnp.mean(mean_log_prob_pos)


if __name__ == "__main__":
    key = jax.random.PRNGKey(0)

    # --- Test 1: single-tile path (bsz=4, views=2, d=32 -> N=8) -------------
    kf, kl, key = jax.random.split(key, 3)
    features = jax.random.normal(kf, (4, 2, 32), dtype=jnp.float32)
    labels = jnp.array([0, 1, 0, 1], dtype=jnp.int32)                # [bsz]
    temperature = jnp.array([0.07], dtype=jnp.float32)               # t_0 init

    loss = jax.block_until_ready(supcon_loss(features, labels, temperature))
    loss_ref = jax.block_until_ready(supcon_loss_ref(features, labels, temperature))
    assert jnp.isfinite(loss), "loss is not finite"
    assert jnp.allclose(loss, loss_ref, rtol=1e-5, atol=1e-5), (loss, loss_ref)

    # --- Test 2: multi-tile path (bsz=16, views=2 -> N=32, TQ forced to 8 so
    #             grid=(4,)) to exercise the row-tiled accumulation. ---------
    kf2, kl2 = jax.random.split(key)
    features2 = jax.random.normal(kf2, (16, 2, 32), dtype=jnp.float32)
    labels2 = jax.random.randint(kl2, (16,), 0, 4, dtype=jnp.int32)
    loss2 = jax.block_until_ready(
        supcon_loss(features2, labels2, temperature, max_row_tile=8))
    loss2_ref = jax.block_until_ready(
        supcon_loss_ref(features2, labels2, temperature))
    assert jnp.isfinite(loss2), "tiled loss is not finite"
    assert jnp.allclose(loss2, loss2_ref, rtol=1e-5, atol=1e-5), (loss2, loss2_ref)

    print("KERNEL_OK")
</pallas_src>

<mosaic_0001>
module attributes {stable_mosaic.version = 11 : i64} {
  func.func @supcon_kernel(%arg0: i32, %arg1: memref<1x1xf32, #tpu.memory_space<smem>>, %arg2: memref<8x32xf32, #tpu.memory_space<vmem>>, %arg3: memref<32x8xf32, #tpu.memory_space<vmem>>, %arg4: memref<1x8xi32, #tpu.memory_space<vmem>>, %arg5: memref<8x1xi32, #tpu.memory_space<vmem>>, %arg6: memref<1x1xf32, #tpu.memory_space<vmem>>) attributes {dimension_semantics = [#tpu.dimension_semantics<arbitrary>], iteration_bounds = array<i64: 1>, scalar_prefetch = 0 : i64, scratch_operands = 0 : i64, tpu.core_type = #tpu.core_type<tc>, window_params = [{transform_indices = @transform_0, window_bounds = array<i64: 1, 1>}, {transform_indices = @transform_1, window_bounds = array<i64: 8, 32>}, {pipeline_mode = #tpu.pipeline_mode<synchronous>, transform_indices = @transform_2, window_bounds = array<i64: 32, 8>}, {pipeline_mode = #tpu.pipeline_mode<synchronous>, transform_indices = @transform_3, window_bounds = array<i64: 1, 8>}, {transform_indices = @transform_4, window_bounds = array<i64: 8, 1>}, {pipeline_mode = #tpu.pipeline_mode<synchronous>, transform_indices = @transform_5, window_bounds = array<i64: 1, 1>}]} {
    %c0_i32 = arith.constant 0 : i32
    %0 = arith.cmpi eq, %arg0, %c0_i32 : i32
    %1 = arith.extui %0 : i1 to i32
    %c0_i32_0 = arith.constant 0 : i32
    %2 = arith.cmpi ne, %1, %c0_i32_0 : i32
    scf.if %2 {
      %cst_27 = arith.constant 0.000000e+00 : f32
      %61 = vector.broadcast %cst_27 : f32 to vector<1x1xf32>
      %c0_28 = arith.constant 0 : index
      %c0_29 = arith.constant 0 : index
      %62 = vector.load %arg6[%c0_28, %c0_29] : memref<1x1xf32, #tpu.memory_space<vmem>>, vector<1x1xf32>
      tpu.vector_store %arg6[%c0_28, %c0_29], %61 {strides = array<i32>} : memref<1x1xf32, #tpu.memory_space<vmem>>, vector<1x1xf32>,
    } else {
    }
    %c0 = arith.constant 0 : index
    %c0_1 = arith.constant 0 : index
    %3 = vector.load %arg2[%c0, %c0_1] : memref<8x32xf32, #tpu.memory_space<vmem>>, vector<8x32xf32>
    %c0_2 = arith.constant 0 : index
    %c0_3 = arith.constant 0 : index
    %4 = memref.load %arg1[%c0_2, %c0_3] : memref<1x1xf32, #tpu.memory_space<smem>>
    %5 = math.exp %4 : f32
    %cst = arith.constant 1.000000e+02 : f32
    %6 = arith.maximumf %5, %cst : f32
    %7 = arith.mulf %3, %3 : vector<8x32xf32>
    %cst_4 = arith.constant dense<0.000000e+00> : vector<8xf32>
    %8 = vector.multi_reduction <add>, %7, %cst_4 [1] : vector<8x32xf32> to vector<8xf32>
    %9 = vector.shape_cast %8 : vector<8xf32> to vector<8x1xf32>
    %10 = math.sqrt %9 : vector<8x1xf32>
    %cst_5 = arith.constant 9.99999996E-13 : f32
    %11 = vector.broadcast %cst_5 : f32 to vector<8x1xf32>
    %12 = arith.maximumf %10, %11 : vector<8x1xf32>
    %13 = vector.broadcast %6 : f32 to vector<8x1xf32>
    %14 = arith.divf %13, %12 : vector<8x1xf32>
    %15 = vector.broadcast %14 : vector<8x1xf32> to vector<8x32xf32>
    %16 = arith.mulf %3, %15 : vector<8x32xf32>
    %c0_6 = arith.constant 0 : index
    %c0_7 = arith.constant 0 : index
    %17 = vector.load %arg3[%c0_6, %c0_7] : memref<32x8xf32, #tpu.memory_space<vmem>>, vector<32x8xf32>
    %cst_8 = arith.constant dense<0.000000e+00> : vector<8x8xf32>
    %18 = tpu.matmul %16, %17, %cst_8 {dimension_numbers = #tpu.dot_dimension_numbers<[1], [0], [0], [1], [0, 0, 1, 1], [], []>} : vector<8x32xf32>, vector<32x8xf32>, vector<8x8xf32> -> vector<8x8xf32>
    %cst_9 = arith.constant dense<0xFF800000> : vector<8xf32>
    %19 = vector.multi_reduction <maximumf>, %18, %cst_9 [1] : vector<8x8xf32> to vector<8xf32>
    %20 = vector.shape_cast %19 : vector<8xf32> to vector<8x1xf32>
    %21 = vector.broadcast %20 : vector<8x1xf32> to vector<8x8xf32>
    %22 = arith.subf %18, %21 : vector<8x8xf32>
    %c8_i32 = arith.constant 8 : i32
    %23 = arith.muli %arg0, %c8_i32 : i32
    %24 = tpu.iota {dimensions = array<i32: 0>} : vector<8x8xi32>
    %25 = vector.broadcast %23 : i32 to vector<8x8xi32>
    %26 = arith.addi %25, %24 : vector<8x8xi32>
    %27 = tpu.iota {dimensions = array<i32: 1>} : vector<8x8xi32>
    %28 = arith.cmpi ne, %26, %27 : vector<8x8xi32>
    %c0_10 = arith.constant 0 : index
    %c0_11 = arith.constant 0 : index
    %29 = vector.load %arg5[%c0_10, %c0_11] : memref<8x1xi32, #tpu.memory_space<vmem>>, vector<8x1xi32>
    %c0_12 = arith.constant 0 : index
    %c0_13 = arith.constant 0 : index
    %30 = vector.load %arg4[%c0_12, %c0_13] : memref<1x8xi32, #tpu.memory_space<vmem>>, vector<1x8xi32>
    %31 = vector.broadcast %29 : vector<8x1xi32> to vector<8x8xi32>
    %32 = vector.broadcast %30 : vector<1x8xi32> to vector<8x8xi32>
    %33 = arith.cmpi eq, %31, %32 : vector<8x8xi32>
    %34 = arith.andi %33, %28 : vector<8x8xi1>
    %35 = math.exp %22 : vector<8x8xf32>
    %cst_14 = arith.constant 0.000000e+00 : f32
    %36 = vector.broadcast %cst_14 : f32 to vector<8x8xf32>
    %37 = arith.select %28, %35, %36 : vector<8x8xi1>, vector<8x8xf32>
    %cst_15 = arith.constant dense<0.000000e+00> : vector<8xf32>
    %38 = vector.multi_reduction <add>, %37, %cst_15 [1] : vector<8x8xf32> to vector<8xf32>
    %39 = vector.shape_cast %38 : vector<8xf32> to vector<8x1xf32>
    %cst_16 = arith.constant 9.99999993E-9 : f32
    %40 = vector.broadcast %cst_16 : f32 to vector<8x1xf32>
    %41 = arith.addf %39, %40 : vector<8x1xf32>
    %42 = math.log %41 : vector<8x1xf32>
    %cst_17 = arith.constant 0.000000e+00 : f32
    %43 = vector.broadcast %cst_17 : f32 to vector<8x8xf32>
    %44 = arith.select %34, %22, %43 : vector<8x8xi1>, vector<8x8xf32>
    %cst_18 = arith.constant dense<0.000000e+00> : vector<8xf32>
    %45 = vector.multi_reduction <add>, %44, %cst_18 [1] : vector<8x8xf32> to vector<8xf32>
    %46 = vector.shape_cast %45 : vector<8xf32> to vector<8x1xf32>
    %47 = arith.extui %34 : vector<8x8xi1> to vector<8x8xi32>
    %48 = arith.sitofp %47 : vector<8x8xi32> to vector<8x8xf32>
    %cst_19 = arith.constant dense<0.000000e+00> : vector<8xf32>
    %49 = vector.multi_reduction <add>, %48, %cst_19 [1] : vector<8x8xf32> to vector<8xf32>
    %50 = vector.shape_cast %49 : vector<8xf32> to vector<8x1xf32>
    %51 = arith.divf %46, %50 : vector<8x1xf32>
    %52 = arith.subf %51, %42 : vector<8x1xf32>
    %c0_20 = arith.constant 0 : index
    %c0_21 = arith.constant 0 : index
    %53 = vector.load %arg6[%c0_20, %c0_21] : memref<1x1xf32, #tpu.memory_space<vmem>>, vector<1x1xf32>
    %cst_22 = arith.constant dense<0.000000e+00> : vector<1xf32>
    %54 = vector.multi_reduction <add>, %52, %cst_22 [0] : vector<8x1xf32> to vector<1xf32>
    %55 = vector.shape_cast %54 : vector<1xf32> to vector<1x1xf32>
    %56 = arith.addf %53, %55 : vector<1x1xf32>
    %c0_23 = arith.constant 0 : index
    %c0_24 = arith.constant 0 : index
    %57 = vector.load %arg6[%c0_23, %c0_24] : memref<1x1xf32, #tpu.memory_space<vmem>>, vector<1x1xf32>
    tpu.vector_store %arg6[%c0_23, %c0_24], %56 {strides = array<i32>} : memref<1x1xf32, #tpu.memory_space<vmem>>, vector<1x1xf32>,
    %c0_i32_25 = arith.constant 0 : i32
    %58 = arith.cmpi eq, %arg0, %c0_i32_25 : i32
    %59 = arith.extui %58 : i1 to i32
    %c0_i32_26 = arith.constant 0 : i32
    %60 = arith.cmpi ne, %59, %c0_i32_26 : i32
    scf.if %60 {
      %c0_27 = arith.constant 0 : index
      %c0_28 = arith.constant 0 : index
      %61 = vector.load %arg6[%c0_27, %c0_28] : memref<1x1xf32, #tpu.memory_space<vmem>>, vector<1x1xf32>
      %cst_29 = arith.constant 0.000000e+00 : f32
      %62 = vector.broadcast %cst_29 : f32 to vector<1x1xf32>
      %63 = arith.subf %62, %61 : vector<1x1xf32>
      %cst_30 = arith.constant 8.000000e+00 : f32
      %64 = vector.broadcast %cst_30 : f32 to vector<1x1xf32>
      %65 = arith.divf %63, %64 : vector<1x1xf32>
      %c0_31 = arith.constant 0 : index
      %c0_32 = arith.constant 0 : index
      %66 = vector.load %arg6[%c0_31, %c0_32] : memref<1x1xf32, #tpu.memory_space<vmem>>, vector<1x1xf32>
      tpu.vector_store %arg6[%c0_31, %c0_32], %65 {strides = array<i32>} : memref<1x1xf32, #tpu.memory_space<vmem>>, vector<1x1xf32>,
    } else {
    }
    return
  }
  func.func @transform_0(%arg0: i32) -> (i32, i32) {
    %c0_i32 = arith.constant 0 : i32
    %c0_i32_0 = arith.constant 0 : i32
    %c0_i32_1 = arith.constant 0 : i32
    return %c0_i32, %c0_i32_0 : i32, i32
  }
  func.func @transform_1(%arg0: i32) -> (i32, i32) {
    %c0_i32 = arith.constant 0 : i32
    %c0_i32_0 = arith.constant 0 : i32
    return %arg0, %c0_i32 : i32, i32
  }
  func.func @transform_2(%arg0: i32) -> (i32, i32) {
    %c0_i32 = arith.constant 0 : i32
    %c0_i32_0 = arith.constant 0 : i32
    %c0_i32_1 = arith.constant 0 : i32
    return %c0_i32, %c0_i32_0 : i32, i32
  }
  func.func @transform_3(%arg0: i32) -> (i32, i32) {
    %c0_i32 = arith.constant 0 : i32
    %c0_i32_0 = arith.constant 0 : i32
    %c0_i32_1 = arith.constant 0 : i32
    return %c0_i32, %c0_i32_0 : i32, i32
  }
  func.func @transform_4(%arg0: i32) -> (i32, i32) {
    %c0_i32 = arith.constant 0 : i32
    %c0_i32_0 = arith.constant 0 : i32
    return %arg0, %c0_i32 : i32, i32
  }
  func.func @transform_5(%arg0: i32) -> (i32, i32) {
    %c0_i32 = arith.constant 0 : i32
    %c0_i32_0 = arith.constant 0 : i32
    %c0_i32_1 = arith.constant 0 : i32
    return %c0_i32, %c0_i32_0 : i32, i32
  }
}

</mosaic_0001>

<llo_original>
// kernel: tpu_custom_call.1
$region0: #{tpu_custom_call.1}
  #allocation0 [shape = 'u32[]', space=smem, size = 0x4, offset = 0x4, fixed_abs, tag = 'smem constant byte address 0x4 - core index']
  #allocation1 [shape = 'u32[72,128]{1,0:T(1,128)}', space=vmem, size = 0x9000, scoped, tag = 'internal scratch']
  #allocation2 [shape = 'f32[1,1]{1,0:T(1,128)S(6)}', space=smem, size = 0x200, scoped, tag = 'scoped memory for tpu_custom_call.1']
  %s0 = inlined_call_operand.<no memory space> [shape: f32[1,1], index: 0, kind: input, shape index: {}]
  %s1 = inlined_call_operand.vmem [shape: f32[8,32], index: 1, kind: input, shape index: {}]
  %s2 = inlined_call_operand.vmem [shape: f32[32,8], index: 2, kind: input, shape index: {}]
  %s3 = inlined_call_operand.vmem [shape: s32[1,8], index: 3, kind: input, shape index: {}]
  %s4 = inlined_call_operand.vmem [shape: s32[8,1], index: 4, kind: input, shape index: {}]
  %s5 = inlined_call_operand.hbm [shape: f32[1,1], index: 5, kind: output, shape index: {}]
  %s6 = sld [smem:[#allocation0]]
  $region38: #{tpu_custom_call.1} parent=0
    _
  %s8 = ssub.s32 1, %s6
  %s9 = scalar_select 0, %s8, %s6
  %10 = sst [smem:[#allocation2]] %s0
  $region1: #{tpu_custom_call.1} parent=0
    #allocation3 [shape = 'u8[512]{0}', space=vmem, size = 0x400, scoped, tag = 'output window, operand 0, single buffered']
    #allocation4 [shape = 's32[1]{0}', space=sflag, size = 0x4, scoped, tag = 'scoped memory for tpu_custom_call.1']
    %11 = vsyncpa [#allocation4], 0
    // Predicated region
    $region2: #{tpu_custom_call.1} parent=1 // pred_check
      _
    $region3: #{tpu_custom_call.1} parent=1 // pred_check_branch
      %13 = sbr.rel (0) target = $region5
    $region4: #{tpu_custom_call.1} parent=1 // pred_region
      _
    $region5: #{tpu_custom_call.1} parent=1 // pred_fallthru
      _
    // Predicated region
    $region6: #{tpu_custom_call.1} parent=1 // pred_check
      _
    $region7: #{tpu_custom_call.1} parent=1 // pred_check_branch
      %15 = sbr.rel (0) target = $region9
    $region8: #{tpu_custom_call.1} parent=1 // pred_region
      _
    $region9: #{tpu_custom_call.1} parent=1 // pred_fallthru
      _
    // Predicated region
    $region10: #{tpu_custom_call.1} parent=1 // pred_check
      _
    $region11: #{tpu_custom_call.1} parent=1 // pred_check_branch
      %17 = sbr.rel (0) target = $region13
    $region12: #{tpu_custom_call.1} parent=1 // pred_region
      _
    $region13: #{tpu_custom_call.1} parent=1 // pred_fallthru
      _
    // Predicated region
    $region14: #{tpu_custom_call.1} parent=1 // pred_check
      _
    $region15: #{tpu_custom_call.1} parent=1 // pred_check_branch
      %19 = sbr.rel (0) target = $region17
    $region16: #{tpu_custom_call.1} parent=1 // pred_region
      _
    $region17: #{tpu_custom_call.1} parent=1 // pred_fallthru
      _
    // Predicated region
    $region18: #{tpu_custom_call.1} parent=1 // pred_check
      _
    $region19: #{tpu_custom_call.1} parent=1 // pred_check_branch
      %21 = sbr.rel (0) target = $region21
    $region20: #{tpu_custom_call.1} parent=1 // pred_region
      _
    $region21: #{tpu_custom_call.1} parent=1 // pred_fallthru
      _
    %p22 = scmp.eq.s32.totalorder 0, 0
    // Predicated region
    $region22: #{tpu_custom_call.1} parent=1 // pred_check
      %p23 = pneg %p22
    $region23: #{tpu_custom_call.1} parent=1 // pred_check_branch
      %25 = sbr.rel (%p23) target = $region25
    $region24: #{tpu_custom_call.1} parent=1 // pred_region
      %vm26 = vcmask 0
      %27 = vst.msk [vmem:[#allocation3] sm:$0x1] %vm26, 0.0
    $region25: #{tpu_custom_call.1} parent=1 // pred_fallthru
      _
    %v28 = vld [vmem:[%s1] sm:$0xff]
    %s29 = sld [smem:[#allocation2]]
    %v30 = vstv %s29
    %v31 = vmul.f32 %v30, 1.442695
    %v32 = vpow.pop %v31
    %s33 = vtos %v32
    %s34 = smax.f32 %s33, 100.0
    %v35 = vmul.f32 %v28, %v28
    %vm36 = vcmask 261120
    %v37 = vsel %vm36, %v35, 0.0
    %38 = vadd.xlane.f32.xlu0 %v37
    %v39 = vpop.xlane.xlu0 %38
    %v40 = vrsqrt.pop %v39
    %v41 = vmul.f32 %v40, %v39
    %v42 = vmul.f32 %v41, %v40
    %v43 = vmul.f32 0.5, %v42
    %v44 = vsub.f32 1.5, %v43
    %v45 = vmul.f32 %v40, %v44
    %v46 = vmul.f32 %v39, %v45
    %vm47 = vcmp.eq.f32.partialorder %v39, inf
    %v48 = vsel %vm47, %v39, %v46
    %vm49 = vcmp.eq.f32.partialorder %v39, 0.0
    %v50 = vand.u32 %v39, 2147483648
    %v51 = vsel %vm49, %v50, %v48
    %v52 = vmax.f32 %v51, 1e-12
    %v53 = vstv %s34
    %v54 = vrcp.pop %v52
    %v55 = vmul.f32 %v52, %v54
    %v56 = vsub.f32 1.0, %v55
    %v57 = vmul.f32 %v54, %v56
    %v58 = vadd.f32 %v54, %v57
    %vm59 = vweird.f32 %v52
    %vm60 = vweird.f32 %v54
    %vm61 = vmor %vm59, %vm60
    %v62 = vsel %vm61, %v54, %v58
    %v63 = vand.u32 2147483647, %v52
    %vm64 = vcmp.eq.f32.partialorder %v63, 8.507059e+37
    %v65 = vand.u32 %v52, 2147483648
    %v66 = vor.u32 1.1754944e-38, %v65
    %v67 = vsel %vm64, %v66, %v62
    %v68 = vmul.f32 %v53, %v67
    %v69 = vmul.f32 %v28, %v68
    %v70 = vld [vmem:[%s2] sm:$0xff]
    %v71 = vld [vmem:[%s2 + $0x8] sm:$0xff]
    %v72 = vld [vmem:[%s2 + $0x10] sm:$0xff]
    %v73 = vld [vmem:[%s2 + $0x18] sm:$0xff]
    %v75 = vsel %vm36, %v69, 0
    %77 = vmatpush.msra.mxu0 0.0
    %78 = vmatpush.msra.mxu0 0.0
    %79 = vmatpush.msra.mxu0 0.0
    %80 = vmatpush.msra.mxu0 0.0
    %81 = vmatpush.msra.mxu0 0.0
    %82 = vmatpush.msra.mxu0 0.0
    %83 = vmatpush.msra.mxu0 0.0
    %84 = vmatpush.msra.mxu0 0.0
    %85 = vmatpush.msra.mxu0 0.0
    %86 = vmatpush.msra.mxu0 0.0
    %87 = vmatpush.msra.mxu0 0.0
    %88 = vmatpush.msra.mxu0 0.0
    %89 = vmatpush.msra.mxu0 %v73
    %90 = vmatpush.msra.mxu0 %v72
    %91 = vmatpush.msra.mxu0 %v71
    %92 = vmatpush.msra.mxu0 %v70
    %93 = vmatmul.f32.gmra.mxu0 %v75
    %v94 = vpop.f32.mrf.mxu0
    %v95 = vadd.f32 0.0, %v94
    %96 = vdwg.mxu0
    %vm97 = vcmask 64512
    %v98 = vsel %vm97, %v95, -inf
    %99 = vmax.xlane.f32.xlu0 %v98
    %v100 = vpop.xlane.xlu0 %99
    %v101 = vsub.f32 %v95, %v100
    %s102 = smul.u32 0, 8
    %v103 = vlaneseq
    %v104 = vshrl.u32 %v103, 7
    %v105 = vstv %s102
    %v106 = vadd.s32 %v105, %v104
    %v107 = vlaneseq
    %v108 = vand.u32 %v107, 127
    %vm109 = vcmp.ne.s32.totalorder %v106, %v108
    %v110 = vld [vmem:[%s4] sm:$0xff]
    %v111 = vld [vmem:[%s3] sm:$0x1]
    %112 = vset.pattern.permute.xlu0 0
    %113 = vperm.xlu0 %112, %v110
    %v114 = vpop.permute.xlu0 %113
    %v115 = vperm.slane %v111, 0
    %vm116 = vcmp.eq.s32.totalorder %v114, %v115
    %vm117 = vmand %vm116, %vm109
    %v118 = vmul.f32 %v101, 1.442695
    %v119 = vpow.pop %v118
    %v120 = vsel %vm109, %v119, 0.0
    %v121 = vsel %vm97, %v120, 0.0
    %122 = vadd.xlane.f32.xlu0 %v121
    %v123 = vpop.xlane.xlu0 %122
    %v124 = vadd.f32 %v123, 1e-08
    %v125 = vlog2.pop %v124
    %v126 = vmul.f32 %v125, 0.6931472
    %v127 = vsel %vm117, %v101, 0.0
    %v128 = vsel %vm97, %v127, 0.0
    %129 = vadd.xlane.f32.xlu0 %v128
    %v130 = vpop.xlane.xlu0 %129
    %v131 = vsel %vm117, 1, 0
    %v132 = vcvt.s32.f32 %v131
    %v133 = vsel %vm97, %v132, 0.0
    %134 = vadd.xlane.f32.xlu0 %v133
    %v135 = vpop.xlane.xlu0 %134
    %v136 = vrcp.pop %v135
    %v137 = vmul.f32 %v135, %v136
    %v138 = vsub.f32 1.0, %v137
    %v139 = vmul.f32 %v136, %v138
    %v140 = vadd.f32 %v136, %v139
    %vm141 = vweird.f32 %v135
    %vm142 = vweird.f32 %v136
    %vm143 = vmor %vm141, %vm142
    %v144 = vsel %vm143, %v136, %v140
    %v145 = vand.u32 2147483647, %v135
    %vm146 = vcmp.eq.f32.partialorder %v145, 8.507059e+37
    %v147 = vand.u32 %v135, 2147483648
    %v148 = vor.u32 1.1754944e-38, %v147
    %v149 = vsel %vm146, %v148, %v144
    %v150 = vmul.f32 %v130, %v149
    %v151 = vsub.f32 %v150, %v126
    %v152 = vld [vmem:[#allocation3] sm:$0x1]
    %v153 = vrot.slane %v151, 4
    %v154 = vadd.f32 %v151, %v153
    %v155 = vrot.slane %v154, 2
    %v156 = vadd.f32 %v154, %v155
    %v157 = vrot.slane %v156, 1
    %v158 = vadd.f32 %v156, %v157
    %v159 = vadd.f32 %v152, %v158
    %vm160 = vcmask 0
    %161 = vst.msk [vmem:[#allocation3] sm:$0x1] %vm160, %v159
    // Predicated region
    $region26: #{tpu_custom_call.1} parent=1 // pred_check
      %p162 = pneg %p22
    $region27: #{tpu_custom_call.1} parent=1 // pred_check_branch
      %164 = sbr.rel (%p162) target = $region29
    $region28: #{tpu_custom_call.1} parent=1 // pred_region
      %v165 = vld [vmem:[#allocation3] sm:$0x1]
      %v166 = vsub.f32 0.0, %v165
      %v167 = vrcp.pop 8.0
      %v168 = vmul.f32 8.0, %v167
      %v169 = vsub.f32 1.0, %v168
      %v170 = vmul.f32 %v167, %v169
      %v171 = vadd.f32 %v167, %v170
      %vm172 = vweird.f32 %v167
      %v173 = vsel %vm172, %v167, %v171
      %v174 = vmul.f32 %v166, %v173
      %175 = vst.msk [vmem:[#allocation3] sm:$0x1] %vm160, %v174
    $region29: #{tpu_custom_call.1} parent=1 // pred_fallthru
      _
    // Predicated region
    $region30: #{tpu_custom_call.1} parent=1 // pred_check
      _
    $region31: #{tpu_custom_call.1} parent=1 // pred_check_branch
      %177 = sbr.rel (0) target = $region33
    $region32: #{tpu_custom_call.1} parent=1 // pred_region
      %179 = vsyncadd [#allocation4], 0
      %s181 = sshll.u32 [#allocation3], 4
      %s182 = int_to_ptr.vmem [resolvable:$true] %s181
      %s183 = sshll.u32 %s5, 4
      %s184 = int_to_ptr.hbm [resolvable:$true] %s183
      %186 = dma.vmem_to_hbm [thread:$0]  %s182, 16, %s184, [#allocation4]
    $region33: #{tpu_custom_call.1} parent=1 // pred_fallthru
      _
    // Predicated region
    $region34: #{tpu_custom_call.1} parent=1 // pred_check
      _
    $region35: #{tpu_custom_call.1} parent=1 // pred_check_branch
      %188 = sbr.rel (0) target = $region37
    $region36: #{tpu_custom_call.1} parent=1 // pred_region
      %190 = dma.done [#allocation4], 16
    $region37: #{tpu_custom_call.1} parent=1 // pred_fallthru
      _
    %191 = vsyncpa [#allocation4], 1

</llo_original>
